<compile_context>
chip_gen: v5e
topology: v5e:2x2
jax: 0.10.0
libtpu: 0.0.40
codegen_flags: <defaults>
</compile_context>

<pallas_src>
import functools

import jax
import jax.numpy as jnp
import numpy as np
from jax.experimental import pallas as pl
from jax.experimental.pallas import tpu as pltpu


# --------------------------------------------------------------------------
# pltpu.roll direction probe (lazy + cached).
# --------------------------------------------------------------------------
_ROLL_SIGN_CACHE = []


def _roll_probe_kernel(x_ref, o_ref):
    o_ref[...] = pltpu.roll(x_ref[...], shift=1, axis=1)


def _roll_sign():
    if not _ROLL_SIGN_CACHE:
        with jax.ensure_compile_time_eval():
            x = jnp.tile(jnp.arange(128, dtype=jnp.float32)[None, :], (8, 1))
            vm = pl.BlockSpec(memory_space=pltpu.MemorySpace.VMEM)
            out = pl.pallas_call(
                _roll_probe_kernel,
                out_shape=jax.ShapeDtypeStruct((8, 128), jnp.float32),
                in_specs=[vm],
                out_specs=vm,
            )(x)
            out = jax.block_until_ready(out)
            # +1  <=>  pltpu.roll matches jnp.roll (result[i] = x[i - shift])
            _ROLL_SIGN_CACHE.append(1 if int(out[0, 1]) == 0 else -1)
    return _ROLL_SIGN_CACHE[0]


def _shift_cols(x, s):
    """result[:, p] = x[:, p + s].  Wrap-around only touches padding raster positions of
    the first/last padded image in the chunk (chunks are whole padded images), which are
    discarded downstream, so a plain rotation suffices."""
    if s == 0:
        return x
    n = x.shape[-1]
    return pltpu.roll(x, shift=(_roll_sign() * (-s)) % n, axis=1)


# --------------------------------------------------------------------------
# Pallas kernels
# --------------------------------------------------------------------------
def _conv_relu_pool_kernel(x_ref, w_ref, b_ref, o_ref, patches_ref, *, wp, chunk, pool):
    """Fused 3x3 conv (pad=1) + bias + ReLU (+ 2x2 max pre-reduction).

    x_ref:       (Cin, Npos)  channel-major zero-padded raster (f32), Npos = imgs*Hp*Wp.
    w_ref:       (Cout, Kpad) bf16, feature order (ky, kx, ci), zero-padded to Kpad.
    b_ref:       (Cout, 1)    f32.
    o_ref:       (Cout, Npos) f32 conv output on the padded raster; when pool=True the
                 2x2 max is pre-reduced onto each window's top-left raster position.
    patches_ref: (Kpad, chunk) bf16 scratch reused for every chunk (in-kernel im2col).
    """
    cin, npos = x_ref.shape
    kreal = 9 * cin
    kpad = patches_ref.shape[0]
    if kpad > kreal:  # zero the K-padding rows once; never overwritten below
        patches_ref[kreal:, :] = jnp.zeros((kpad - kreal, chunk), patches_ref.dtype)

    # Per-chunk loop bounds live values to ~one chunk (keeps vreg pressure low) and keeps
    # the im2col scratch tiny.  Offsets are static multiples of 128 -> aligned accesses.
    for c in range(npos // chunk):
        col = c * chunk
        xc = x_ref[:, pl.ds(col, chunk)].astype(patches_ref.dtype)
        k = 0
        for dy in (-1, 0, 1):
            for dx in (-1, 0, 1):
                patches_ref[k * cin:(k + 1) * cin, :] = _shift_cols(xc, dy * wp + dx)
                k += 1
        acc = jnp.dot(w_ref[...], patches_ref[...], preferred_element_type=jnp.float32)
        acc = jnp.maximum(acc + b_ref[...], 0.0)
        if pool:
            a = jnp.maximum(acc, _shift_cols(acc, 1))    # max over (w, w+1)
            acc = jnp.maximum(a, _shift_cols(a, wp))     # then over (h, h+1)
        o_ref[:, pl.ds(col, chunk)] = acc


def _head_kernel(x_ref, w1_ref, b1_ref, p_ref, w2_ref, b2_ref, o_ref):
    # fc1 (bf16 x bf16 -> f32 accumulate; w1 stored bf16 to halve the dominant DMA)
    z = jnp.dot(x_ref[...].astype(jnp.bfloat16), w1_ref[...],
                preferred_element_type=jnp.float32) + b1_ref[...]
    # custom "power" Function forward: clamp(min=0); x**p where x>0 else 0
    pos = jnp.maximum(z, 0.0)
    safe = jnp.where(pos > 0.0, pos, 1.0)
    powed = jnp.where(pos > 0.0, jnp.exp(p_ref[...] * jnp.log(safe)), 0.0)
    # fc2 + softmax(dim=1)
    logits = jnp.dot(powed, w2_ref[...], preferred_element_type=jnp.float32) + b2_ref[...]
    m = jnp.max(logits, axis=-1, keepdims=True)
    e = jnp.exp(logits - m)
    o_ref[...] = e / jnp.sum(e, axis=-1, keepdims=True)


# --------------------------------------------------------------------------
# pallas_call wrappers (grid=(): one invocation, whole operands resident in VMEM)
# --------------------------------------------------------------------------
_VMEM = pl.BlockSpec(memory_space=pltpu.MemorySpace.VMEM)


def conv_stage(x2d, w_mat, b_col, *, wp, img, chunk, pool):
    """x2d: (Cin, Npos) zero-padded channel-major raster.  Returns (Cout, Npos) f32."""
    cin, npos = x2d.shape
    cout, kpad = w_mat.shape
    assert kpad == ((9 * cin + 7) // 8) * 8
    # Chunk boundaries must coincide with padded-image boundaries (roll-wrap safety)
    # and with 128-lane boundaries (aligned loads/stores).
    assert chunk % img == 0 and chunk % 128 == 0 and npos % chunk == 0
    _roll_sign()  # resolve the pltpu.roll convention before tracing the kernel body
    kernel = functools.partial(_conv_relu_pool_kernel, wp=wp, chunk=chunk, pool=pool)
    return pl.pallas_call(
        kernel,
        out_shape=jax.ShapeDtypeStruct((cout, npos), jnp.float32),
        in_specs=[_VMEM, _VMEM, _VMEM],
        out_specs=_VMEM,
        scratch_shapes=[pltpu.VMEM((kpad, chunk), jnp.bfloat16)],
    )(x2d, w_mat, b_col)


def head(x, w1, b1, p, w2, b2):
    batch = x.shape[0]
    nout = w2.shape[1]
    return pl.pallas_call(
        _head_kernel,
        out_shape=jax.ShapeDtypeStruct((batch, nout), jnp.float32),
        in_specs=[_VMEM] * 6,
        out_specs=_VMEM,
    )(x, w1, b1, p, w2, b2)


# --------------------------------------------------------------------------
# Forward pass (XLA glue between stages is only cheap pad / stride-2 select / reshape)
# --------------------------------------------------------------------------
def net_forward(x_nchw, params):
    B = x_nchw.shape[0]
    assert x_nchw.shape == (16, 3, 28, 28)  # forced by Pow(16,128) and Linear(7*7*64)

    # stage 1: channel-major raster, zero-pad 28x28 -> 30x32 (lane-friendly W),
    #          channels padded 3 -> 4 so bf16 patch stores stay packed-word aligned.
    xt = jnp.transpose(x_nchw, (1, 0, 2, 3))                    # (3, B, 28, 28)
    xt = jnp.pad(xt, ((0, 1), (0, 0), (1, 1), (1, 3)))          # (4, B, 30, 32)
    o1 = conv_stage(xt.reshape(4, B * 960), params["c1_wm"], params["c1_b"],
                    wp=32, img=960, chunk=1920, pool=True)      # (16, B*960)

    # pool selection (max already pre-reduced in-kernel) + re-pad 14x14 -> 16x16
    p1 = o1.reshape(16, B, 30, 32)[:, :, 1:29:2, 1:29:2]        # (16, B, 14, 14)
    p1 = jnp.pad(p1, ((0, 0), (0, 0), (1, 1), (1, 1)))          # (16, B, 16, 16)
    o2 = conv_stage(p1.reshape(16, B * 256), params["c2_wm"], params["c2_b"],
                    wp=16, img=256, chunk=512, pool=True)       # (32, B*256)

    # pool selection + re-pad 7x7 -> 9x16
    p2 = o2.reshape(32, B, 16, 16)[:, :, 1:15:2, 1:15:2]        # (32, B, 7, 7)
    p2 = jnp.pad(p2, ((0, 0), (0, 0), (1, 1), (1, 8)))          # (32, B, 9, 16)
    o3 = conv_stage(p2.reshape(32, B * 144), params["c3_wm"], params["c3_b"],
                    wp=16, img=144, chunk=1152, pool=False)     # (64, B*144)

    # valid 7x7 region, flattened in PyTorch NCHW order (channel-major -> batch-major)
    # TODO(synk): the pool/re-pad glue and this slice+transpose could be folded into the
    #             kernels' output writes; at ~1 MiB total it is left to XLA fusion.
    a3 = o3.reshape(64, B, 9, 16)[:, :, 1:8, 1:8]               # (64, B, 7, 7)
    flat = jnp.transpose(a3, (1, 0, 2, 3)).reshape(B, 64 * 7 * 7)

    return head(flat, params["fc1_wt"], params["fc1_b"],
                params["pow_p"], params["fc2_wt"], params["fc2_b"])  # (B, 10)


# --------------------------------------------------------------------------
# Parameters: raw (PyTorch layouts, for the reference) and kernel-ready layouts
# prepared ONCE at init (transposes, zero padding, bf16 casts).
# --------------------------------------------------------------------------
def init_params(key):
    ks = jax.random.split(key, 11)

    def n(k, shape, scale):
        return (scale * jax.random.normal(k, shape)).astype(jnp.float32)

    raw = {
        "c1_w": n(ks[0], (16, 3, 3, 3), 1.0 / (27 ** 0.5)),
        "c1_b": n(ks[1], (16,), 0.05),
        "c2_w": n(ks[2], (32, 16, 3, 3), 1.0 / (144 ** 0.5)),
        "c2_b": n(ks[3], (32,), 0.05),
        "c3_w": n(ks[4], (64, 32, 3, 3), 1.0 / (288 ** 0.5)),
        "c3_b": n(ks[5], (64,), 0.05),
        "fc1_w": n(ks[6], (128, 7 * 7 * 64), 1.0 / (3136 ** 0.5)),
        "fc1_b": n(ks[7], (128,), 0.05),
        # Pow(16, 128) parameter; tamed around 1.0 for numerical sanity
        "pow_p": (1.0 + 0.1 * jax.random.normal(ks[8], (16, 128))).astype(jnp.float32),
        "fc2_w": n(ks[9], (10, 128), 1.0 / (128 ** 0.5)),
        "fc2_b": n(ks[10], (10,), 0.05),
    }

    def conv_wm(w, cin_pad):
        # (Cout, Cin, 3, 3) -> (Cout, Kpad) bf16, features (ky, kx, ci), ci/K zero-padded
        cout, cin = w.shape[0], w.shape[1]
        wt = jnp.transpose(w, (0, 2, 3, 1))                     # (Cout, ky, kx, ci)
        if cin_pad != cin:
            wt = jnp.pad(wt, ((0, 0), (0, 0), (0, 0), (0, cin_pad - cin)))
        wt = wt.reshape(cout, 9 * cin_pad)
        kpad = ((9 * cin_pad + 7) // 8) * 8
        if kpad != 9 * cin_pad:
            wt = jnp.pad(wt, ((0, 0), (0, kpad - 9 * cin_pad)))
        return wt.astype(jnp.bfloat16)

    prepped = {
        "c1_wm": conv_wm(raw["c1_w"], 4),   "c1_b": raw["c1_b"].reshape(-1, 1),
        "c2_wm": conv_wm(raw["c2_w"], 16),  "c2_b": raw["c2_b"].reshape(-1, 1),
        "c3_wm": conv_wm(raw["c3_w"], 32),  "c3_b": raw["c3_b"].reshape(-1, 1),
        "fc1_wt": raw["fc1_w"].T.astype(jnp.bfloat16),
        "fc1_b": raw["fc1_b"].reshape(1, -1),
        "pow_p": raw["pow_p"],
        "fc2_wt": raw["fc2_w"].T,           "fc2_b": raw["fc2_b"].reshape(1, -1),
    }
    return raw, prepped


# --------------------------------------------------------------------------
# Pure-JAX reference (mirrors the PyTorch module) for a correctness check.
# --------------------------------------------------------------------------
def reference_forward(x_nchw, raw):
    def conv_relu(x, w, b):
        y = jax.lax.conv_general_dilated(
            x, w, window_strides=(1, 1), padding=((1, 1), (1, 1)),
            dimension_numbers=("NCHW", "OIHW", "NCHW"))
        return jnp.maximum(y + b[None, :, None, None], 0.0)

    def pool(x):
        return jax.lax.reduce_window(x, -jnp.inf, jax.lax.max,
                                     (1, 1, 2, 2), (1, 1, 2, 2), "VALID")

    x = pool(conv_relu(x_nchw, raw["c1_w"], raw["c1_b"]))
    x = pool(conv_relu(x, raw["c2_w"], raw["c2_b"]))
    x = conv_relu(x, raw["c3_w"], raw["c3_b"])
    x = x.reshape(x.shape[0], -1)
    z = x @ raw["fc1_w"].T + raw["fc1_b"]
    pos = jnp.maximum(z, 0.0)
    powed = jnp.where(pos > 0.0,
                      jnp.exp(raw["pow_p"] * jnp.log(jnp.where(pos > 0.0, pos, 1.0))),
                      0.0)
    logits = powed @ raw["fc2_w"].T + raw["fc2_b"]
    m = jnp.max(logits, axis=1, keepdims=True)
    e = jnp.exp(logits - m)
    return e / jnp.sum(e, axis=1, keepdims=True)


if __name__ == "__main__":
    key = jax.random.PRNGKey(0)
    pkey, xkey = jax.random.split(key)
    raw, params = init_params(pkey)
    # batch must be 16 (Pow(16,128)) and spatial 28x28 (Linear(7*7*64))
    x = jax.random.normal(xkey, (16, 3, 28, 28), dtype=jnp.float32)

    _roll_sign()  # resolve the pltpu.roll rotation convention before tracing

    fwd = jax.jit(net_forward)
    out = jax.block_until_ready(fwd(x, params))

    assert out.shape == (16, 10) and out.dtype == jnp.float32
    ref = reference_forward(x, raw)
    # bf16 conv patches/weights and bf16 fc1 weight -> loosened tolerance vs f32 reference
    np.testing.assert_allclose(np.asarray(out), np.asarray(ref), atol=4e-2, rtol=1e-1)
    print("KERNEL_OK")
</pallas_src>

<mosaic_0001>
module attributes {stable_mosaic.version = 11 : i64} {
  func.func @_roll_probe_kernel(%arg0: memref<8x128xf32, #tpu.memory_space<vmem>>, %arg1: memref<8x128xf32, #tpu.memory_space<vmem>>) attributes {dimension_semantics = [], scalar_prefetch = 0 : i64, scratch_operands = 0 : i64, tpu.core_type = #tpu.core_type<tc>} {
    %c0 = arith.constant 0 : index
    %c0_0 = arith.constant 0 : index
    %0 = vector.load %arg0[%c0, %c0_0] : memref<8x128xf32, #tpu.memory_space<vmem>>, vector<8x128xf32>
    %c1_i32 = arith.constant 1 : i32
    %1 = tpu.dynamic_rotate %0 by %c1_i32 dim 1 : vector<8x128xf32>, i32 -> vector<8x128xf32>
    %c0_1 = arith.constant 0 : index
    %c0_2 = arith.constant 0 : index
    %2 = vector.load %arg1[%c0_1, %c0_2] : memref<8x128xf32, #tpu.memory_space<vmem>>, vector<8x128xf32>
    tpu.vector_store %arg1[%c0_1, %c0_2], %1 {strides = array<i32>} : memref<8x128xf32, #tpu.memory_space<vmem>>, vector<8x128xf32>,
    return
  }
}

</mosaic_0001>

<llo_original>
// kernel: tpu_custom_call.1
$region0: #{tpu_custom_call.1}
  #allocation0 [shape = 'u32[]', space=smem, size = 0x4, offset = 0x4, fixed_abs, tag = 'smem constant byte address 0x4 - core index']
  #allocation1 [shape = 'u32[72,128]{1,0:T(1,128)}', space=vmem, size = 0x9000, scoped, tag = 'internal scratch']
  %s0 = inlined_call_operand.hbm [shape: f32[8,128], index: 0, kind: input, shape index: {}]
  %s1 = inlined_call_operand.hbm [shape: f32[8,128], index: 1, kind: output, shape index: {}]
  %s2 = sld [smem:[#allocation0]]
  $region18: #{tpu_custom_call.1} parent=0
    _
  %s4 = ssub.s32 1, %s2
  %s5 = scalar_select 0, %s4, %s2
  $region1: #{tpu_custom_call.1} parent=0
    #allocation2 [shape = 'u8[4096]{0}', space=vmem, size = 0x1000, scoped, tag = 'input window, operand 0, single buffered']
    #allocation3 [shape = 's32[1]{0}', space=sflag, size = 0x4, scoped, tag = 'scoped memory for tpu_custom_call.1']
    #allocation4 [shape = 's32[1]{0}', space=sflag, size = 0x4, scoped, tag = 'scoped memory for tpu_custom_call.1']
    #allocation5 [shape = 'u8[4096]{0}', space=vmem, size = 0x1000, scoped, tag = 'output window, operand 0, single buffered']
    %6 = vsyncpa [#allocation3], 0
    %7 = vsyncpa [#allocation4], 0
    // Predicated region
    $region2: #{tpu_custom_call.1} parent=1 // pred_check
      _
    $region3: #{tpu_custom_call.1} parent=1 // pred_check_branch
      %9 = sbr.rel (0) target = $region5
    $region4: #{tpu_custom_call.1} parent=1 // pred_region
      %11 = vsyncadd [#allocation3], 0
      %s13 = sshll.u32 %s0, 4
      %s14 = int_to_ptr.hbm [resolvable:$true] %s13
      %s15 = sshll.u32 [#allocation2], 4
      %s16 = int_to_ptr.vmem [resolvable:$true] %s15
      %18 = dma.hbm_to_vmem [thread:$0]  %s14, 128, %s16, [#allocation3]
    $region5: #{tpu_custom_call.1} parent=1 // pred_fallthru
      _
    // Predicated region
    $region6: #{tpu_custom_call.1} parent=1 // pred_check
      _
    $region7: #{tpu_custom_call.1} parent=1 // pred_check_branch
      %20 = sbr.rel (0) target = $region9
    $region8: #{tpu_custom_call.1} parent=1 // pred_region
      %22 = dma.done [#allocation3], 128
    $region9: #{tpu_custom_call.1} parent=1 // pred_fallthru
      _
    %v23 = vld [vmem:[#allocation2] sm:$0xff]
    %24 = vrot.lane.b32.xlu0 %v23, 1
    %v25 = vpop.permute.xlu0 %24
    %26 = vst [vmem:[#allocation5] sm:$0xff] %v25
    // Predicated region
    $region10: #{tpu_custom_call.1} parent=1 // pred_check
      _
    $region11: #{tpu_custom_call.1} parent=1 // pred_check_branch
      %28 = sbr.rel (0) target = $region13
    $region12: #{tpu_custom_call.1} parent=1 // pred_region
      %30 = vsyncadd [#allocation4], 0
      %s32 = sshll.u32 [#allocation5], 4
      %s33 = int_to_ptr.vmem [resolvable:$true] %s32
      %s34 = sshll.u32 %s1, 4
      %s35 = int_to_ptr.hbm [resolvable:$true] %s34
      %37 = dma.vmem_to_hbm [thread:$0]  %s33, 128, %s35, [#allocation4]
    $region13: #{tpu_custom_call.1} parent=1 // pred_fallthru
      _
    // Predicated region
    $region14: #{tpu_custom_call.1} parent=1 // pred_check
      _
    $region15: #{tpu_custom_call.1} parent=1 // pred_check_branch
      %39 = sbr.rel (0) target = $region17
    $region16: #{tpu_custom_call.1} parent=1 // pred_region
      %41 = dma.done [#allocation4], 128
    $region17: #{tpu_custom_call.1} parent=1 // pred_fallthru
      _
    %42 = vsyncpa [#allocation3], 1
    %43 = vsyncpa [#allocation4], 1

</llo_original>
